<compile_context>
chip_gen: v6e
topology: v6e:2x2x1
jax: 0.10.0
libtpu: 0.0.40
codegen_flags: <defaults>
</compile_context>

<pallas_src>
import jax
import jax.numpy as jnp
from jax.experimental import pallas as pl
from jax.experimental.pallas import tpu as pltpu

DTYPE = jnp.bfloat16


# ---------------------------------------------------------------------------
# Per-generation tiling defaults
# ---------------------------------------------------------------------------
def _chip_defaults():
    """(BLOCK_N, INTER_TILE, vmem_cap_bytes) per TPU generation.

    BLOCK_N sets the arithmetic intensity of the expert weight stream
    (~BN flops/byte), chosen per chip to reach the MXU roofline while staying
    inside VMEM (128 MiB on v5e/v6e, 64 MiB per TensorCore on v7x).
    """
    kind = ""
    try:
        kind = jax.devices()[0].device_kind.lower()
    except Exception:
        pass
    if "v6" in kind:
        return 512, 512, 104 * (1 << 20)
    if "v7" in kind:
        return 384, 256, 56 * (1 << 20)
    if "v5 lite" in kind or "v5lite" in kind or "v5e" in kind:
        return 256, 512, 96 * (1 << 20)
    # conservative fallback (v4 / v5p / unknown)
    return 256, 256, 64 * (1 << 20)


def _expert_vmem_bytes(bn, ti, h):
    """Expert-kernel working set: double-buffered tiles + f32 accumulator."""
    x_b = bn * h * 2            # bf16 input tile
    o_b = bn * h * 2            # bf16 output tile
    w13_b = h * (2 * ti) * 2    # fused up-projection tile
    w2_b = ti * h * 2           # down-projection tile
    gate_b = bn * 128 * 4       # (BN, 1) f32 gate tile (lane padded)
    acc_b = bn * h * 4          # f32 accumulator scratch
    return 2 * (x_b + o_b + w13_b + w2_b + gate_b) + acc_b


# ---------------------------------------------------------------------------
# Pallas kernels
# ---------------------------------------------------------------------------
def _router_kernel(x_ref, wt_ref, o_ref):
    # logits = x @ W_router^T; the transpose was done once at weight-prepare time,
    # so the resident (H, E) weight tile is contracted in place every grid step.
    o_ref[...] = jnp.dot(
        x_ref[...], wt_ref[...], preferred_element_type=jnp.float32
    ).astype(o_ref.dtype)


def _make_expert_kernel(ti):
    """Expert MLP on one (BN, H) grouped block, tiled over the intermediate dim.

    Grid = (NB, NI): axis 0 iterates padded per-expert blocks (parallel / megacore),
    axis 1 iterates intermediate tiles (reduction for the down-projection).
    Invalid trailing blocks (block index >= num_valid) skip all compute.
    """

    def kernel(nv_ref, be_ref, x_ref, gate_ref, w13_ref, w2_ref, o_ref, acc_ref):
        # nv_ref: (1,) number of valid blocks (scalar prefetch, SMEM)
        # be_ref: (NB,) expert id per block (used by the weight index maps)
        # x_ref:    (BN, H)      grouped (expert-sorted, padded) inputs, bf16
        # gate_ref: (BN, 1)      f32 routing gates (0 for padding rows)
        # w13_ref:  (H, 2*TI)    fused [w1 tile | w3 tile] for this expert / i-tile
        # w2_ref:   (TI, H)      down-projection tile
        # o_ref:    (BN, H)      per-block gated output (lane-dense, bf16)
        # acc_ref:  (BN, H) f32  accumulator across intermediate tiles
        b = pl.program_id(0)
        i = pl.program_id(1)
        valid = b < nv_ref[0]

        @pl.when(valid)
        def _():
            @pl.when(i == 0)
            def _():
                acc_ref[...] = jnp.zeros_like(acc_ref)

            x = x_ref[...]                                            # (BN, H) bf16
            h13 = jnp.dot(x, w13_ref[...], preferred_element_type=jnp.float32)
            h1 = h13[:, :ti]
            h3 = h13[:, ti:]
            inter = (jax.nn.silu(h1) * h3).astype(x.dtype)            # (BN, TI) bf16
            acc_ref[...] += jnp.dot(
                inter, w2_ref[...], preferred_element_type=jnp.float32
            )

        @pl.when(i == pl.num_programs(1) - 1)
        def _():
            # gate folded into the epilogue (free VPU work under the MXU);
            # invalid blocks write zeros (their rows scatter to the dropped slot).
            gated = acc_ref[...] * gate_ref[...]
            o_ref[...] = jnp.where(valid, gated, 0.0).astype(o_ref.dtype)

    return kernel


# ---------------------------------------------------------------------------
# One-time (init-time) weight preparation
# ---------------------------------------------------------------------------
def prepare_scatter_moe_params(router_w, w1, w2, w3, *, inter_tile=None):
    """Build the fused, tile-interleaved up-projection weight and the pre-transposed
    router weight once, instead of re-materializing them on every forward call."""
    E, H, I = w1.shape
    assert I % 128 == 0, "intermediate_size must be a multiple of 128"
    if inter_tile is None:
        _, inter_tile, _ = _chip_defaults()
    ti = min(inter_tile, I)
    while I % ti != 0:
        ti -= 128
    assert ti >= 128 and ti % 128 == 0
    ni = I // ti
    # per i-tile layout: [w1 tile | w3 tile] so one (BN,H)@(H,2*TI) matmul per tile
    w13 = jnp.concatenate(
        [w1.reshape(E, H, ni, 1, ti), w3.reshape(E, H, ni, 1, ti)], axis=3
    ).reshape(E, H, 2 * I)
    return {
        "router_wt": jnp.swapaxes(router_w, 0, 1),  # (H, E)
        "w13": w13,                                 # (E, H, 2*I), tile-interleaved
        "w2": w2,                                   # (E, I, H)
        "inter_tile": ti,
    }


# ---------------------------------------------------------------------------
# Forward wrapper (routing / sort / block packing are host glue, matching the
# scattermoe host logic)
# ---------------------------------------------------------------------------
def scatter_moe_forward(hidden_states, params, top_k, *, block_n=None):
    orig_shape = hidden_states.shape
    router_wt = params["router_wt"]
    w13 = params["w13"]
    w2 = params["w2"]
    TI = params["inter_tile"]

    H, E = router_wt.shape
    I = w2.shape[1]
    NI = I // TI

    x = hidden_states.reshape(-1, H)            # (T, H)
    T = x.shape[0]
    K = top_k
    N = T * K

    # ---- per-generation block size + explicit VMEM budget ----
    bn_def, _, vmem_cap = _chip_defaults()
    BN = bn_def if block_n is None else block_n
    while _expert_vmem_bytes(BN, TI, H) + (8 << 20) > vmem_cap and BN > 128:
        BN -= 128
    vmem_limit = int(min(vmem_cap, _expert_vmem_bytes(BN, TI, H) + (32 << 20)))

    # ---- router: tiled (128, H) @ (H, E) matmul, f32 logits ----
    TM = 128
    Tp = -(-T // TM) * TM
    x_r = x if Tp == T else jnp.concatenate(
        [x, jnp.zeros((Tp - T, H), x.dtype)], axis=0)
    logits = pl.pallas_call(
        _router_kernel,
        out_shape=jax.ShapeDtypeStruct((Tp, E), jnp.float32),
        grid_spec=pltpu.PrefetchScalarGridSpec(
            num_scalar_prefetch=0,
            grid=(Tp // TM,),
            in_specs=[
                pl.BlockSpec((TM, H), lambda i: (i, 0)),
                pl.BlockSpec((H, E), lambda i: (0, 0)),
            ],
            out_specs=pl.BlockSpec((TM, E), lambda i: (i, 0)),
        ),
        compiler_params=pltpu.CompilerParams(dimension_semantics=("parallel",)),
    )(x_r, router_wt)[:T]

    rw = jax.nn.softmax(logits, axis=-1)                          # f32 routing
    rw_topk, selected = jax.lax.top_k(rw, K)
    rw_topk = rw_topk / jnp.sum(rw_topk, axis=-1, keepdims=True)  # (T, K) f32

    # ---- sort grouped (token, slot) pairs by expert ----
    flat_sel = selected.reshape(-1).astype(jnp.int32)             # (N,)
    sort_idx = jnp.argsort(flat_sel, stable=True)                 # sorted_scattered_idxs
    tok = (sort_idx // K).astype(jnp.int32)                       # source/dest token per row
    gate = rw_topk.reshape(-1)[sort_idx]                          # (N,) f32

    # ---- padded per-expert blocks (static worst-case block count) ----
    NB = -(-N // BN) + E
    counts = jnp.bincount(flat_sel, length=E)
    offsets = (jnp.cumsum(counts) - counts).astype(jnp.int32)
    blocks_per = (counts + BN - 1) // BN
    cum_blocks = jnp.cumsum(blocks_per)
    block_starts = (cum_blocks - blocks_per).astype(jnp.int32)
    num_valid = cum_blocks[-1].astype(jnp.int32)                  # # of non-padded blocks

    b_idx = jnp.arange(NB)
    e_raw = jnp.searchsorted(cum_blocks, b_idx, side="right")
    valid_block = b_idx < num_valid
    e_last = e_raw[num_valid - 1]                                 # expert of last valid block
    # invalid (trailing) blocks keep pointing at the last valid expert so the weight
    # tiles stay resident (no extra weight stream) while the kernel body is skipped.
    e_b = jnp.where(valid_block, e_raw, e_last).astype(jnp.int32)

    lb = b_idx - block_starts[e_b]
    row_start = offsets[e_b] + lb * BN
    nvalid = jnp.where(valid_block, jnp.clip(counts[e_b] - lb * BN, 0, BN), 0)
    jj = jnp.arange(BN)
    src = jnp.where(
        jj[None, :] < nvalid[:, None], row_start[:, None] + jj[None, :], N
    ).reshape(-1)                                                 # N is the dummy slot

    # ---- composed gather: packed row -> original token (row T of x_pad = zeros) ----
    tok_ext = jnp.concatenate([tok, jnp.full((1,), T, jnp.int32)])
    gate_ext = jnp.concatenate([gate, jnp.zeros((1,), gate.dtype)])
    tok_packed = tok_ext[src]                                     # (NB*BN,) dest tokens
    gate_packed = gate_ext[src].reshape(NB * BN, 1)               # f32, 0 for padding
    x_pad = jnp.concatenate([x, jnp.zeros((1, H), x.dtype)], axis=0)
    xg_packed = x_pad[tok_packed]                                 # (NB*BN, H)

    nv_pref = num_valid.reshape(1)
    last_i = NI - 1

    kernel = _make_expert_kernel(TI)
    grid_spec = pltpu.PrefetchScalarGridSpec(
        num_scalar_prefetch=2,
        grid=(NB, NI),
        in_specs=[
            # invalid trailing blocks clamp to the last valid block / last i-tile so
            # consecutive invalid steps re-use the resident buffers (no DMA at all).
            pl.BlockSpec((BN, H),
                         lambda b, i, nv, be: (jnp.minimum(b, nv[0] - 1), 0)),
            pl.BlockSpec((BN, 1),
                         lambda b, i, nv, be: (jnp.minimum(b, nv[0] - 1), 0)),
            pl.BlockSpec(
                (pl.Squeezed(), H, 2 * TI),
                lambda b, i, nv, be: (be[b], 0, jnp.where(b < nv[0], i, last_i)),
            ),
            pl.BlockSpec(
                (pl.Squeezed(), TI, H),
                lambda b, i, nv, be: (be[b], jnp.where(b < nv[0], i, last_i), 0),
            ),
        ],
        out_specs=pl.BlockSpec((BN, H), lambda b, i, nv, be: (b, 0)),
        scratch_shapes=[pltpu.VMEM((BN, H), jnp.float32)],
    )

    y = pl.pallas_call(
        kernel,
        out_shape=jax.ShapeDtypeStruct((NB * BN, H), x.dtype),
        grid_spec=grid_spec,
        compiler_params=pltpu.CompilerParams(
            dimension_semantics=("parallel", "arbitrary"),
            vmem_limit_bytes=vmem_limit,
        ),
    )(nv_pref, e_b, xg_packed, gate_packed, w13, w2)              # (NB*BN, H) gated outputs

    # ---- scatter-add back to tokens (gate already applied in-kernel; padding and
    #      invalid-block rows land on the dropped row T) ----
    out = (
        jnp.zeros((T + 1, H), jnp.float32)
        .at[tok_packed]
        .add(y.astype(jnp.float32))[:T]
    )
    out = out.astype(hidden_states.dtype).reshape(orig_shape)

    # Routing was done in f32; logits returned in f32 (caller may cast).
    return out, logits


# ---------------------------------------------------------------------------
# Pure-JAX reference (dense per-slot), using the same router logits
# ---------------------------------------------------------------------------
def reference_from_logits(hidden_states, logits, w1, w2, w3, top_k):
    H = w1.shape[1]
    x = hidden_states.reshape(-1, H)
    T = x.shape[0]
    rw = jax.nn.softmax(logits.astype(jnp.float32), axis=-1)
    rw_topk, sel = jax.lax.top_k(rw, top_k)
    rw_topk = rw_topk / rw_topk.sum(-1, keepdims=True)            # f32

    out = jnp.zeros((T, H), jnp.float32)
    xf = x.astype(jnp.float32)
    for k in range(top_k):
        e = sel[:, k]
        h1 = jnp.einsum("th,thi->ti", xf, w1[e].astype(jnp.float32))
        h3 = jnp.einsum("th,thi->ti", xf, w3[e].astype(jnp.float32))
        inter = (jax.nn.silu(h1) * h3).astype(DTYPE)
        y = jnp.einsum("ti,tih->th", inter.astype(jnp.float32), w2[e].astype(jnp.float32))
        out += y * rw_topk[:, k: k + 1]
    return out.astype(hidden_states.dtype).reshape(hidden_states.shape)


if __name__ == "__main__":
    # small shapes consistent with the module
    B, S = 2, 8            # batch, seq -> T = 16 tokens
    H = 128                # hidden_size
    I = 256                # intermediate_size
    E = 8                  # num_experts
    TOP_K = 2

    key = jax.random.PRNGKey(0)
    k1, k2, k3, k4, k5 = jax.random.split(key, 5)
    router_w = (jax.random.normal(k1, (E, H), jnp.float32) / jnp.sqrt(H)).astype(DTYPE)
    w1 = (jax.random.normal(k2, (E, H, I), jnp.float32) / jnp.sqrt(H)).astype(DTYPE)
    w3 = (jax.random.normal(k3, (E, H, I), jnp.float32) / jnp.sqrt(H)).astype(DTYPE)
    w2 = (jax.random.normal(k4, (E, I, H), jnp.float32) / jnp.sqrt(I)).astype(DTYPE)
    hidden_states = jax.random.normal(k5, (B, S, H), jnp.float32).astype(DTYPE)

    # init-time weight preparation (fused w13 + pre-transposed router weight)
    params = prepare_scatter_moe_params(router_w, w1, w2, w3)

    out, router_logits = scatter_moe_forward(hidden_states, params, TOP_K)
    out = jax.block_until_ready(out)
    router_logits = jax.block_until_ready(router_logits)

    ref = reference_from_logits(hidden_states, router_logits, w1, w2, w3, TOP_K)
    assert out.shape == hidden_states.shape
    assert router_logits.shape == (B * S, E)
    assert jnp.allclose(
        out.astype(jnp.float32), ref.astype(jnp.float32), atol=5e-2, rtol=5e-2
    ), "mismatch vs reference"

    print("KERNEL_OK")
</pallas_src>

<mosaic_0001>
module attributes {stable_mosaic.version = 11 : i64} {
  func.func @_router_kernel(%arg0: i32, %arg1: memref<128x128xbf16, #tpu.memory_space<vmem>>, %arg2: memref<128x8xbf16, #tpu.memory_space<vmem>>, %arg3: memref<128x8xf32, #tpu.memory_space<vmem>>) attributes {dimension_semantics = [#tpu.dimension_semantics<parallel>], iteration_bounds = array<i64: 1>, scalar_prefetch = 0 : i64, scratch_operands = 0 : i64, tpu.core_type = #tpu.core_type<tc>, window_params = [{transform_indices = @transform_0, window_bounds = array<i64: 128, 128>}, {pipeline_mode = #tpu.pipeline_mode<synchronous>, transform_indices = @transform_1, window_bounds = array<i64: 128, 8>}, {transform_indices = @transform_2, window_bounds = array<i64: 128, 8>}]} {
    %c0 = arith.constant 0 : index
    %c0_0 = arith.constant 0 : index
    %0 = vector.load %arg1[%c0, %c0_0] : memref<128x128xbf16, #tpu.memory_space<vmem>>, vector<128x128xbf16>
    %c0_1 = arith.constant 0 : index
    %c0_2 = arith.constant 0 : index
    %1 = vector.load %arg2[%c0_1, %c0_2] : memref<128x8xbf16, #tpu.memory_space<vmem>>, vector<128x8xbf16>
    %cst = arith.constant dense<0.000000e+00> : vector<128x8xf32>
    %2 = tpu.matmul %0, %1, %cst {dimension_numbers = #tpu.dot_dimension_numbers<[1], [0], [0], [1], [0, 0, 1, 1], [], []>} : vector<128x128xbf16>, vector<128x8xbf16>, vector<128x8xf32> -> vector<128x8xf32>
    %c0_3 = arith.constant 0 : index
    %c0_4 = arith.constant 0 : index
    %3 = vector.load %arg3[%c0_3, %c0_4] : memref<128x8xf32, #tpu.memory_space<vmem>>, vector<128x8xf32>
    tpu.vector_store %arg3[%c0_3, %c0_4], %2 {strides = array<i32>} : memref<128x8xf32, #tpu.memory_space<vmem>>, vector<128x8xf32>,
    return
  }
  func.func @transform_0(%arg0: i32) -> (i32, i32) {
    %c0_i32 = arith.constant 0 : i32
    %c0_i32_0 = arith.constant 0 : i32
    return %arg0, %c0_i32 : i32, i32
  }
  func.func @transform_1(%arg0: i32) -> (i32, i32) {
    %c0_i32 = arith.constant 0 : i32
    %c0_i32_0 = arith.constant 0 : i32
    %c0_i32_1 = arith.constant 0 : i32
    return %c0_i32, %c0_i32_0 : i32, i32
  }
  func.func @transform_2(%arg0: i32) -> (i32, i32) {
    %c0_i32 = arith.constant 0 : i32
    %c0_i32_0 = arith.constant 0 : i32
    return %arg0, %c0_i32 : i32, i32
  }
}

</mosaic_0001>

<llo_original>
// kernel: tpu_custom_call.1
$region0: #{tpu_custom_call.1}
  #allocation0 [shape = 'u32[]', space=smem, size = 0x4, offset = 0x4, fixed_abs, tag = 'smem constant byte address 0x4 - core index']
  #allocation1 [shape = 'u32[144,128]{1,0:T(1,128)}', space=vmem, size = 0x12000, scoped, tag = 'internal scratch']
  %s0 = inlined_call_operand.vmem [shape: bf16[128,128], index: 0, kind: input, shape index: {}]
  %s1 = inlined_call_operand.vmem [shape: bf16[128,8], index: 1, kind: input, shape index: {}]
  %s2 = inlined_call_operand.vmem [shape: f32[128,8], index: 2, kind: output, shape index: {}]
  %s3 = sld [smem:[#allocation0]]
  $region18: #{tpu_custom_call.1} parent=0
    _
  %s5 = ssub.s32 1, %s3
  %s6 = scalar_select 0, %s5, %s3
  // Predicated region
  $region2: #{tpu_custom_call.1} parent=0 // pred_check
    _
  $region3: #{tpu_custom_call.1} parent=0 // pred_check_branch
    %8 = sbr.rel (0) target = $region5
  $region4: #{tpu_custom_call.1} parent=0 // pred_region
    _
  $region5: #{tpu_custom_call.1} parent=0 // pred_fallthru
    _
  // Predicated region
  $region6: #{tpu_custom_call.1} parent=0 // pred_check
    _
  $region7: #{tpu_custom_call.1} parent=0 // pred_check_branch
    %10 = sbr.rel (0) target = $region9
  $region8: #{tpu_custom_call.1} parent=0 // pred_region
    _
  $region9: #{tpu_custom_call.1} parent=0 // pred_fallthru
    _
  %v12 = vld [vmem:[%s0] sm:$0xf]
  %v13 = vld [vmem:[%s0 + $0x4] sm:$0xf]
  %v14 = vld [vmem:[%s0 + $0x8] sm:$0xf]
  %v15 = vld [vmem:[%s0 + $0xc] sm:$0xf]
  %v16 = vld [vmem:[%s0 + $0x10] sm:$0xf]
  %v17 = vld [vmem:[%s0 + $0x14] sm:$0xf]
  %v18 = vld [vmem:[%s0 + $0x18] sm:$0xf]
  %v19 = vld [vmem:[%s0 + $0x1c] sm:$0xf]
  %v20 = vld [vmem:[%s0 + $0x20] sm:$0xf]
  %v21 = vld [vmem:[%s0 + $0x24] sm:$0xf]
  %v22 = vld [vmem:[%s0 + $0x28] sm:$0xf]
  %v23 = vld [vmem:[%s0 + $0x2c] sm:$0xf]
  %v24 = vld [vmem:[%s0 + $0x30] sm:$0xf]
  %v25 = vld [vmem:[%s0 + $0x34] sm:$0xf]
  %v26 = vld [vmem:[%s0 + $0x38] sm:$0xf]
  %v27 = vld [vmem:[%s0 + $0x3c] sm:$0xf]
  %v28 = vld [vmem:[%s1] sm:$0xf]
  %v29 = vld [vmem:[%s1 + $0x4] sm:$0xf]
  %v30 = vld [vmem:[%s1 + $0x8] sm:$0xf]
  %v31 = vld [vmem:[%s1 + $0xc] sm:$0xf]
  %v32 = vld [vmem:[%s1 + $0x10] sm:$0xf]
  %v33 = vld [vmem:[%s1 + $0x14] sm:$0xf]
  %v34 = vld [vmem:[%s1 + $0x18] sm:$0xf]
  %v35 = vld [vmem:[%s1 + $0x1c] sm:$0xf]
  %v36 = vld [vmem:[%s1 + $0x20] sm:$0xf]
  %v37 = vld [vmem:[%s1 + $0x24] sm:$0xf]
  %v38 = vld [vmem:[%s1 + $0x28] sm:$0xf]
  %v39 = vld [vmem:[%s1 + $0x2c] sm:$0xf]
  %v40 = vld [vmem:[%s1 + $0x30] sm:$0xf]
  %v41 = vld [vmem:[%s1 + $0x34] sm:$0xf]
  %v42 = vld [vmem:[%s1 + $0x38] sm:$0xf]
  %v43 = vld [vmem:[%s1 + $0x3c] sm:$0xf]
  %v60 = vunpack.c.l.b16 %v12
  %v61 = vunpack.c.l.b16 %v13
  %v62 = vunpack.c.l.b16 %v14
  %v63 = vunpack.c.l.b16 %v15
  %v64 = vunpack.c.l.b16 %v16
  %v65 = vunpack.c.l.b16 %v17
  %v66 = vunpack.c.l.b16 %v18
  %v67 = vunpack.c.l.b16 %v19
  %v68 = vunpack.c.l.b16 %v20
  %v69 = vunpack.c.l.b16 %v21
  %v70 = vunpack.c.l.b16 %v22
  %v71 = vunpack.c.l.b16 %v23
  %v72 = vunpack.c.l.b16 %v24
  %v73 = vunpack.c.l.b16 %v25
  %v74 = vunpack.c.l.b16 %v26
  %v75 = vunpack.c.l.b16 %v27
  %v76 = vpack.c.b16 %v61, %v60
  %v77 = vpack.c.b16 %v63, %v62
  %v78 = vpack.c.b16 %v65, %v64
  %v79 = vpack.c.b16 %v67, %v66
  %v80 = vpack.c.b16 %v69, %v68
  %v81 = vpack.c.b16 %v71, %v70
  %v82 = vpack.c.b16 %v73, %v72
  %v83 = vpack.c.b16 %v75, %v74
  %v108 = vunpack.c.l.b16 %v28
  %v109 = vunpack.c.l.b16 %v29
  %v110 = vunpack.c.l.b16 %v30
  %v111 = vunpack.c.l.b16 %v31
  %v112 = vunpack.c.l.b16 %v32
  %v113 = vunpack.c.l.b16 %v33
  %v114 = vunpack.c.l.b16 %v34
  %v115 = vunpack.c.l.b16 %v35
  %v116 = vunpack.c.l.b16 %v36
  %v117 = vunpack.c.l.b16 %v37
  %v118 = vunpack.c.l.b16 %v38
  %v119 = vunpack.c.l.b16 %v39
  %v120 = vunpack.c.l.b16 %v40
  %v121 = vunpack.c.l.b16 %v41
  %v122 = vunpack.c.l.b16 %v42
  %v123 = vunpack.c.l.b16 %v43
  %v124 = vpack.c.b16 %v109, %v108
  %v125 = vpack.c.b16 %v111, %v110
  %v126 = vpack.c.b16 %v113, %v112
  %v127 = vpack.c.b16 %v115, %v114
  %v128 = vpack.c.b16 %v117, %v116
  %v129 = vpack.c.b16 %v119, %v118
  %v130 = vpack.c.b16 %v121, %v120
  %v131 = vpack.c.b16 %v123, %v122
  %140 = vmatprep.subr.bf16.mxu0 0
  %141 = vmatpush1.bf16.msra.mxu0 %v131
  %142 = vmatprep.subr.bf16.mxu0 0
  %143 = vmatpush1.bf16.msra.mxu0 %v130
  %144 = vmatprep.subr.bf16.mxu0 0
  %145 = vmatpush1.bf16.msra.mxu0 %v129
  %146 = vmatprep.subr.bf16.mxu0 0
  %147 = vmatpush1.bf16.msra.mxu0 %v128
  %148 = vmatprep.subr.bf16.mxu0 0
  %149 = vmatpush1.bf16.msra.mxu0 %v127
  %150 = vmatprep.subr.bf16.mxu0 0
  %151 = vmatpush1.bf16.msra.mxu0 %v126
  %152 = vmatprep.subr.bf16.mxu0 0
  %153 = vmatpush1.bf16.msra.mxu0 %v125
  %154 = vmatprep.subr.bf16.mxu0 0
  %155 = vmatpush1.bf16.msra.mxu0 %v124
  %156 = vmatprep.subr.bf16.mxu0 0
  %157 = vmatpush2.bf16.msra.mxu0 0
  %158 = vmatprep.subr.bf16.mxu0 0
  %159 = vmatpush2.bf16.msra.mxu0 0
  %160 = vmatprep.subr.bf16.mxu0 0
  %161 = vmatpush2.bf16.msra.mxu0 0
  %162 = vmatprep.subr.bf16.mxu0 0
  %163 = vmatpush2.bf16.msra.mxu0 0
  %164 = vmatprep.subr.bf16.mxu0 0
  %165 = vmatpush2.bf16.msra.mxu0 0
  %166 = vmatprep.subr.bf16.mxu0 0
  %167 = vmatpush2.bf16.msra.mxu0 0
  %168 = vmatprep.subr.bf16.mxu0 0
  %169 = vmatpush2.bf16.msra.mxu0 0
  %170 = vmatprep.subr.bf16.mxu0 0
  %171 = vmatpush2.bf16.msra.mxu0 0
  %172 = vmatprep.mubr.bf16.mxu0 0
  %173 = vmatmul.mubr.bf16.gmra.mxu0 %v76
  %v174 = vpop.f32.mrf.mxu0
  %v175 = vadd.f32 0.0, %v174
  %v176 = vpop.f32.mrf.mxu0
  %v177 = vpop.f32.mrf.mxu0
  %v178 = vadd.f32 0.0, %v177
  %v179 = vpop.f32.mrf.mxu0
  %180 = vmatprep.mubr.bf16.mxu0 0
  %181 = vmatmul.mubr.bf16.gmra.mxu0 %v77
  %v182 = vpop.f32.mrf.mxu0
  %v183 = vadd.f32 0.0, %v182
  %v184 = vpop.f32.mrf.mxu0
  %v185 = vpop.f32.mrf.mxu0
  %v186 = vadd.f32 0.0, %v185
  %v187 = vpop.f32.mrf.mxu0
  %188 = vmatprep.mubr.bf16.mxu0 0
  %189 = vmatmul.mubr.bf16.gmra.mxu0 %v78
  %v190 = vpop.f32.mrf.mxu0
  %v191 = vadd.f32 0.0, %v190
  %v192 = vpop.f32.mrf.mxu0
  %v193 = vpop.f32.mrf.mxu0
  %v194 = vadd.f32 0.0, %v193
  %v195 = vpop.f32.mrf.mxu0
  %196 = vmatprep.mubr.bf16.mxu0 0
  %197 = vmatmul.mubr.bf16.gmra.mxu0 %v79
  %v198 = vpop.f32.mrf.mxu0
  %v199 = vadd.f32 0.0, %v198
  %v200 = vpop.f32.mrf.mxu0
  %v201 = vpop.f32.mrf.mxu0
  %v202 = vadd.f32 0.0, %v201
  %v203 = vpop.f32.mrf.mxu0
  %204 = vmatprep.mubr.bf16.mxu0 0
  %205 = vmatmul.mubr.bf16.gmra.mxu0 %v80
  %v206 = vpop.f32.mrf.mxu0
  %v207 = vadd.f32 0.0, %v206
  %v208 = vpop.f32.mrf.mxu0
  %v209 = vpop.f32.mrf.mxu0
  %v210 = vadd.f32 0.0, %v209
  %v211 = vpop.f32.mrf.mxu0
  %212 = vmatprep.mubr.bf16.mxu0 0
  %213 = vmatmul.mubr.bf16.gmra.mxu0 %v81
  %v214 = vpop.f32.mrf.mxu0
  %v215 = vadd.f32 0.0, %v214
  %v216 = vpop.f32.mrf.mxu0
  %v217 = vpop.f32.mrf.mxu0
  %v218 = vadd.f32 0.0, %v217
  %v219 = vpop.f32.mrf.mxu0
  %220 = vmatprep.mubr.bf16.mxu0 0
  %221 = vmatmul.mubr.bf16.gmra.mxu0 %v82
  %v222 = vpop.f32.mrf.mxu0
  %v223 = vadd.f32 0.0, %v222
  %v224 = vpop.f32.mrf.mxu0
  %v225 = vpop.f32.mrf.mxu0
  %v226 = vadd.f32 0.0, %v225
  %v227 = vpop.f32.mrf.mxu0
  %228 = vmatprep.mubr.bf16.mxu0 0
  %229 = vmatmul.mubr.bf16.gmra.mxu0 %v83
  %v230 = vpop.f32.mrf.mxu0
  %v231 = vadd.f32 0.0, %v230
  %v232 = vpop.f32.mrf.mxu0
  %v233 = vpop.f32.mrf.mxu0
  %v234 = vadd.f32 0.0, %v233
  %v235 = vpop.f32.mrf.mxu0
  %236 = vdwg.mxu0
  %vm237 = vcmask 64512
  %238 = vst.msk [vmem:[%s2] sm:$0xff] %vm237, %v175
  %239 = vst.msk [vmem:[%s2 + $0x8] sm:$0xff] %vm237, %v178
  %240 = vst.msk [vmem:[%s2 + $0x10] sm:$0xff] %vm237, %v183
  %241 = vst.msk [vmem:[%s2 + $0x18] sm:$0xff] %vm237, %v186
  %242 = vst.msk [vmem:[%s2 + $0x20] sm:$0xff] %vm237, %v191
  %243 = vst.msk [vmem:[%s2 + $0x28] sm:$0xff] %vm237, %v194
  %244 = vst.msk [vmem:[%s2 + $0x30] sm:$0xff] %vm237, %v199
  %245 = vst.msk [vmem:[%s2 + $0x38] sm:$0xff] %vm237, %v202
  %246 = vst.msk [vmem:[%s2 + $0x40] sm:$0xff] %vm237, %v207
  %247 = vst.msk [vmem:[%s2 + $0x48] sm:$0xff] %vm237, %v210
  %248 = vst.msk [vmem:[%s2 + $0x50] sm:$0xff] %vm237, %v215
  %249 = vst.msk [vmem:[%s2 + $0x58] sm:$0xff] %vm237, %v218
  %250 = vst.msk [vmem:[%s2 + $0x60] sm:$0xff] %vm237, %v223
  %251 = vst.msk [vmem:[%s2 + $0x68] sm:$0xff] %vm237, %v226
  %252 = vst.msk [vmem:[%s2 + $0x70] sm:$0xff] %vm237, %v231
  %253 = vst.msk [vmem:[%s2 + $0x78] sm:$0xff] %vm237, %v234
  // Predicated region
  $region10: #{tpu_custom_call.1} parent=0 // pred_check
    _
  $region11: #{tpu_custom_call.1} parent=0 // pred_check_branch
    %255 = sbr.rel (0) target = $region13
  $region12: #{tpu_custom_call.1} parent=0 // pred_region
    _
  $region13: #{tpu_custom_call.1} parent=0 // pred_fallthru
    _
  // Predicated region
  $region14: #{tpu_custom_call.1} parent=0 // pred_check
    _
  $region15: #{tpu_custom_call.1} parent=0 // pred_check_branch
    %257 = sbr.rel (0) target = $region17
  $region16: #{tpu_custom_call.1} parent=0 // pred_region
    _
  $region17: #{tpu_custom_call.1} parent=0 // pred_fallthru
    _

</llo_original>
